<compile_context>
chip_gen: v5e
topology: v5e:2x2
jax: 0.10.0
libtpu: 0.0.40
codegen_flags: <defaults>
</compile_context>

<pallas_src>
import jax
import jax.numpy as jnp
from jax.experimental import pallas as pl
from jax.experimental.pallas import tpu as pltpu

LANE = 128
VMEM_LIMIT = 32 * 1024 * 1024  # safe on v5e/v6e (128 MiB) and v7x (64 MiB)


def _round_up(x, m):
    return (x + m - 1) // m * m


# ----------------------------- Pallas kernels ------------------------------

def _gemm_bias_relu_kernel(x_ref, w_ref, b_ref, o_ref):
    # conv-as-GEMM (BN scale pre-folded into w) + bias + ReLU
    acc = jnp.dot(x_ref[...], w_ref[...], preferred_element_type=jnp.float32)
    o_ref[...] = jnp.maximum(acc + b_ref[...], 0.0).astype(o_ref.dtype)


def _make_conv3x3_kernel(Wp, with_residual):
    """Fused 3x3 / stride-1 / pad-1 conv (+ folded BN bias [+ residual]) + ReLU.

    x_ref : (1, rows, Cp)  f32, one spatially padded image, rows flattened as
            (h_pad * Wp + w_pad); extra zero rows at the end so all nine
            shifted slabs are in bounds.
    w_ref : (9, Cp, Cp)    bf16, tap-major (kh*3+kw), BN scale folded in.
    b_ref : (1, Cp)        f32 folded BN bias.
    r_ref : (1, R, Cp)     f32 residual in the same "wide" row layout (opt).
    o_ref : (1, R, Cp)     f32 "wide" output; columns w >= W of each row are
            garbage and sliced away by the wrapper.
    """
    def kernel(x_ref, w_ref, b_ref, *rest):
        if with_residual:
            r_ref, o_ref = rest
        else:
            (o_ref,) = rest
        R = o_ref.shape[1]
        Cp = o_ref.shape[2]
        xs = x_ref[0]                                   # (rows, Cp) f32
        acc = jnp.zeros((R, Cp), jnp.float32)
        for kh in range(3):
            for kw in range(3):
                d = kh * Wp + kw
                patch = xs[d:d + R, :].astype(jnp.bfloat16)
                acc = acc + jnp.dot(patch, w_ref[kh * 3 + kw],
                                    preferred_element_type=jnp.float32)
        y = acc + b_ref[...]
        if with_residual:
            y = y + r_ref[0]
        o_ref[0] = jnp.maximum(y, 0.0).astype(o_ref.dtype)

    return kernel


def _maxpool_kernel(x_ref, o_ref):
    # x_ref: (tr, 2, Wo, 2*C) -- 2x2 windows packed by a pure reshape.
    C = o_ref.shape[-1]
    a = jnp.maximum(x_ref[:, 0], x_ref[:, 1])           # max over window rows
    o_ref[...] = jnp.maximum(a[..., :C], a[..., C:])    # max over window cols


def _avgpool_fc_kernel(h_ref, w_ref, b_ref, o_ref):
    # h_ref: (N, H*W, Cp) with channels on lanes; mean over spatial, then FC.
    pooled = jnp.mean(h_ref[...], axis=1)               # (N, Cp)
    o_ref[...] = (jnp.dot(pooled, w_ref[...],
                          preferred_element_type=jnp.float32) + b_ref[...])


# ------------------------------ kernel wrappers -----------------------------

def gemm_bias_relu(x, w, b, *, tm_max=512):
    """relu(x @ w + b) with bf16 MXU operands, lane-dense output, big M tiles."""
    M, K = x.shape
    Cp = w.shape[1]
    tm = min(tm_max, _round_up(M, 8))
    Mp = _round_up(M, tm)
    if Mp != M:
        x = jnp.pad(x, ((0, Mp - M), (0, 0)))

    out = pl.pallas_call(
        _gemm_bias_relu_kernel,
        grid=(Mp // tm,),
        in_specs=[
            pl.BlockSpec((tm, K), lambda i: (i, 0)),
            pl.BlockSpec((K, Cp), lambda i: (0, 0)),   # weight resident across M
            pl.BlockSpec((1, Cp), lambda i: (0, 0)),
        ],
        out_specs=pl.BlockSpec((tm, Cp), lambda i: (i, 0)),
        out_shape=jax.ShapeDtypeStruct((Mp, Cp), jnp.float32),
        compiler_params=pltpu.CompilerParams(
            dimension_semantics=("parallel",),
            vmem_limit_bytes=VMEM_LIMIT),
    )(x.astype(jnp.bfloat16), w.astype(jnp.bfloat16), b)
    return out[:M]


def conv3x3_block(x_nhwc, w9, b, residual_nhwc=None):
    """Fused 3x3 stride-1 pad-1 conv + folded BN [+ residual] + ReLU."""
    N, H, W, Cp = x_nhwc.shape
    Hp, Wp = H + 2, W + 2
    R = H * Wp                           # "wide" output rows per image
    rows = _round_up(R + 2 * Wp + 2, 8)  # cover max tap-shifted read

    xp = jnp.pad(x_nhwc, ((0, 0), (1, 1), (1, 1), (0, 0)))
    xp = xp.reshape(N, Hp * Wp, Cp)
    xp = jnp.pad(xp, ((0, 0), (0, rows - Hp * Wp), (0, 0)))

    with_res = residual_nhwc is not None
    args = [xp, w9.astype(jnp.bfloat16), b]
    in_specs = [
        pl.BlockSpec((1, rows, Cp), lambda n: (n, 0, 0)),
        pl.BlockSpec((9, Cp, Cp), lambda n: (0, 0, 0)),   # resident weights
        pl.BlockSpec((1, Cp), lambda n: (0, 0)),
    ]
    if with_res:
        rwide = jnp.pad(residual_nhwc,
                        ((0, 0), (0, 0), (0, Wp - W), (0, 0))).reshape(N, R, Cp)
        args.append(rwide)
        in_specs.append(pl.BlockSpec((1, R, Cp), lambda n: (n, 0, 0)))

    wide = pl.pallas_call(
        _make_conv3x3_kernel(Wp, with_res),
        grid=(N,),
        in_specs=in_specs,
        out_specs=pl.BlockSpec((1, R, Cp), lambda n: (n, 0, 0)),
        out_shape=jax.ShapeDtypeStruct((N, R, Cp), jnp.float32),
        compiler_params=pltpu.CompilerParams(
            dimension_semantics=("parallel",),
            vmem_limit_bytes=VMEM_LIMIT),
    )(*args)
    # drop the two garbage columns of every wide row
    return wide.reshape(N, H, Wp, Cp)[:, :, :W, :]


def maxpool_2x2(y_nhwc):
    """2x2 / stride-2 max pool; pure reshape feed, gridded lane-dense kernel."""
    N, H, W, C = y_nhwc.shape
    Ho, Wo = H // 2, W // 2
    R = N * Ho
    x = y_nhwc.reshape(R, 2, Wo, 2 * C)   # contiguous reshape, no data movement
    tr = min(256, _round_up(R, 8))
    Rp = _round_up(R, tr)
    if Rp != R:
        x = jnp.pad(x, ((0, Rp - R), (0, 0), (0, 0), (0, 0)))

    out = pl.pallas_call(
        _maxpool_kernel,
        grid=(Rp // tr,),
        in_specs=[pl.BlockSpec((tr, 2, Wo, 2 * C), lambda i: (i, 0, 0, 0))],
        out_specs=pl.BlockSpec((tr, Wo, C), lambda i: (i, 0, 0)),
        out_shape=jax.ShapeDtypeStruct((Rp, Wo, C), jnp.float32),
        compiler_params=pltpu.CompilerParams(
            dimension_semantics=("parallel",),
            vmem_limit_bytes=VMEM_LIMIT),
    )(x)
    return out[:R].reshape(N, Ho, Wo, C)


def avgpool_fc(h_nhwc, wfc_p, bfc_p):
    """Adaptive avg-pool to (1,1) + Linear, channels kept on lanes."""
    N, H, W, Cp = h_nhwc.shape
    h = h_nhwc.reshape(N, H * W, Cp)      # no transpose
    return pl.pallas_call(
        _avgpool_fc_kernel,
        out_shape=jax.ShapeDtypeStruct((N, wfc_p.shape[1]), jnp.float32),
    )(h, wfc_p, bfc_p)


# --------------------------------- glue -------------------------------------

def im2col_s2(x_nhwc, Kp):
    """3x3 / stride 2 / pad 1 im2col; patch order (kh, kw, cin), K padded."""
    N, H, W, Cin = x_nhwc.shape
    xp = jnp.pad(x_nhwc, ((0, 0), (1, 1), (1, 1), (0, 0)))
    Ho = (H + 2 - 3) // 2 + 1
    Wo = (W + 2 - 3) // 2 + 1
    cols = []
    for kh in range(3):
        for kw in range(3):
            cols.append(xp[:, kh:kh + 2 * Ho:2, kw:kw + 2 * Wo:2, :])
    patches = jnp.stack(cols, axis=3).reshape(N * Ho * Wo, 9 * Cin)
    patches = jnp.pad(patches, ((0, 0), (0, Kp - 9 * Cin)))
    return patches, (Ho, Wo)


def fold_bn(gamma, beta, mean, var, eps=1e-5):
    s = gamma / jnp.sqrt(var + eps)
    b = beta - mean * s
    return s, b


# ------------------------------ parameters ----------------------------------

def init_raw_params(key, num_channels, num_classes=10):
    C = num_channels
    ks = jax.random.split(key, 20)

    def bn(k0, k1, k2, k3, c):
        gamma = 1.0 + 0.1 * jax.random.normal(k0, (c,), jnp.float32)
        beta = 0.1 * jax.random.normal(k1, (c,), jnp.float32)
        mean = 0.1 * jax.random.normal(k2, (c,), jnp.float32)
        var = 1.0 + 0.1 * jnp.abs(jax.random.normal(k3, (c,), jnp.float32))
        return dict(gamma=gamma, beta=beta, mean=mean, var=var)

    return dict(
        w1=0.2 * jax.random.normal(ks[0], (C, 1, 3, 3), jnp.float32),
        bn1=bn(ks[1], ks[2], ks[3], ks[4], C),
        w2=0.2 * jax.random.normal(ks[5], (C, C, 3, 3), jnp.float32),
        bn2=bn(ks[6], ks[7], ks[8], ks[9], C),
        w3=0.2 * jax.random.normal(ks[10], (C, C, 3, 3), jnp.float32),
        bn3=bn(ks[11], ks[12], ks[13], ks[14], C),
        wfc=0.2 * jax.random.normal(ks[15], (num_classes, C), jnp.float32),
        bfc=0.1 * jax.random.normal(ks[16], (num_classes,), jnp.float32),
    )


def prep_params(raw, num_channels, num_classes=10):
    """Fold BN into weights/bias, pad channels/classes to lane multiples."""
    C = num_channels
    Cp = _round_up(C, LANE)
    NC = _round_up(num_classes, LANE)

    s1, b1 = fold_bn(**raw["bn1"])
    s2, b2 = fold_bn(**raw["bn2"])
    s3, b3 = fold_bn(**raw["bn3"])

    # conv1: (C,1,3,3) -> rows ordered (kh, kw, cin); fold scale; pad K and C.
    w1 = jnp.transpose(raw["w1"], (2, 3, 1, 0)).reshape(9, C) * s1[None, :]
    K1p = _round_up(9, 16)
    w1p = jnp.zeros((K1p, Cp), jnp.float32).at[:9, :C].set(w1)
    b1p = jnp.zeros((1, Cp), jnp.float32).at[0, :C].set(b1)

    def prep_block_w(w_oihw, s):
        # (Cout,Cin,3,3) -> (9, Cin, Cout), fold scale, pad channels.
        w = jnp.transpose(w_oihw, (2, 3, 1, 0)).reshape(9, C, C) * s[None, None, :]
        return jnp.zeros((9, Cp, Cp), jnp.float32).at[:, :C, :C].set(w)

    w2p = prep_block_w(raw["w2"], s2)
    b2p = jnp.zeros((1, Cp), jnp.float32).at[0, :C].set(b2)
    w3p = prep_block_w(raw["w3"], s3)
    b3p = jnp.zeros((1, Cp), jnp.float32).at[0, :C].set(b3)

    wfcp = jnp.zeros((Cp, NC), jnp.float32).at[:C, :num_classes].set(raw["wfc"].T)
    bfcp = jnp.zeros((1, NC), jnp.float32).at[0, :num_classes].set(raw["bfc"])

    return dict(Cp=Cp, num_classes=num_classes,
                w1=w1p, b1=b1p, w2=w2p, b2=b2p, w3=w3p, b3=b3p,
                wfc=wfcp, bfc=bfcp)


# ------------------------------- forward ------------------------------------

def resnet_forward(x_nchw, params):
    """Pallas ResNet.forward.  x: (N, 1, H, W) -> (N, 10)."""
    N = x_nchw.shape[0]
    Cp = params["Cp"]
    x = jnp.transpose(x_nchw, (0, 2, 3, 1))             # NHWC, Cin = 1

    # conv1 (3x3, stride 2, pad 1) + folded BN + relu
    patches, (Ho, Wo) = im2col_s2(x, params["w1"].shape[0])
    y = gemm_bias_relu(patches, params["w1"], params["b1"])
    y = y.reshape(N, Ho, Wo, Cp)

    # max_pool 2x2 / 2
    y = maxpool_2x2(y)

    # Block: fused conv+bn+relu, fused conv+bn+residual+relu (no im2col in HBM)
    h = conv3x3_block(y, params["w2"], params["b2"])
    h = conv3x3_block(h, params["w3"], params["b3"], residual_nhwc=y)

    # adaptive avg pool (1,1) + flatten + fc
    logits = avgpool_fc(h, params["wfc"], params["bfc"])
    return logits[:, :params["num_classes"]]


# --------------------------- pure-JAX reference ------------------------------

def resnet_reference(x_nchw, raw):
    x = jnp.transpose(x_nchw, (0, 2, 3, 1))

    def conv(x, w_oihw, stride, pad):
        w = jnp.transpose(w_oihw, (2, 3, 1, 0))  # HWIO
        return jax.lax.conv_general_dilated(
            x, w, (stride, stride), [(pad, pad), (pad, pad)],
            dimension_numbers=("NHWC", "HWIO", "NHWC"))

    def bn(x, p, eps=1e-5):
        return (x - p["mean"]) / jnp.sqrt(p["var"] + eps) * p["gamma"] + p["beta"]

    y = jax.nn.relu(bn(conv(x, raw["w1"], 2, 1), raw["bn1"]))
    y = jax.lax.reduce_window(y, -jnp.inf, jax.lax.max,
                              (1, 2, 2, 1), (1, 2, 2, 1), "VALID")
    h = jax.nn.relu(bn(conv(y, raw["w2"], 1, 1), raw["bn2"]))
    h = bn(conv(h, raw["w3"], 1, 1), raw["bn3"]) + y
    h = jax.nn.relu(h)
    pooled = jnp.mean(h, axis=(1, 2))
    return pooled @ raw["wfc"].T + raw["bfc"]


# --------------------------------- main --------------------------------------

if __name__ == "__main__":
    key = jax.random.PRNGKey(0)
    kx, kp = jax.random.split(key)

    N, num_channels, H, W = 2, 4, 16, 16
    x = jax.random.normal(kx, (N, 1, H, W), jnp.float32)  # (N, 1, H, W) as in PyTorch

    raw = init_raw_params(kp, num_channels)
    params = prep_params(raw, num_channels)

    out = resnet_forward(x, params)
    out = jax.block_until_ready(out)
    assert out.shape == (N, 10), out.shape

    ref = resnet_reference(x, raw)
    # bf16 MXU operands -> slightly looser tolerance than the pure-f32 path.
    if not jnp.allclose(out, ref, rtol=5e-2, atol=5e-2):
        raise AssertionError("Pallas output does not match JAX reference")

    print("KERNEL_OK")
</pallas_src>

<mosaic_0001>
module attributes {stable_mosaic.version = 11 : i64} {
  func.func @_gemm_bias_relu_kernel(%arg0: i32, %arg1: memref<128x16xbf16, #tpu.memory_space<vmem>>, %arg2: memref<16x128xbf16, #tpu.memory_space<vmem>>, %arg3: memref<1x128xf32, #tpu.memory_space<vmem>>, %arg4: memref<128x128xf32, #tpu.memory_space<vmem>>) attributes {dimension_semantics = [#tpu.dimension_semantics<parallel>], iteration_bounds = array<i64: 1>, scalar_prefetch = 0 : i64, scratch_operands = 0 : i64, tpu.core_type = #tpu.core_type<tc>, window_params = [{transform_indices = @transform_0, window_bounds = array<i64: 128, 16>}, {pipeline_mode = #tpu.pipeline_mode<synchronous>, transform_indices = @transform_1, window_bounds = array<i64: 16, 128>}, {pipeline_mode = #tpu.pipeline_mode<synchronous>, transform_indices = @transform_2, window_bounds = array<i64: 1, 128>}, {transform_indices = @transform_3, window_bounds = array<i64: 128, 128>}]} {
    %c0 = arith.constant 0 : index
    %c0_0 = arith.constant 0 : index
    %0 = vector.load %arg1[%c0, %c0_0] : memref<128x16xbf16, #tpu.memory_space<vmem>>, vector<128x16xbf16>
    %c0_1 = arith.constant 0 : index
    %c0_2 = arith.constant 0 : index
    %1 = vector.load %arg2[%c0_1, %c0_2] : memref<16x128xbf16, #tpu.memory_space<vmem>>, vector<16x128xbf16>
    %cst = arith.constant dense<0.000000e+00> : vector<128x128xf32>
    %2 = tpu.matmul %0, %1, %cst {dimension_numbers = #tpu.dot_dimension_numbers<[1], [0], [0], [1], [0, 0, 1, 1], [], []>} : vector<128x16xbf16>, vector<16x128xbf16>, vector<128x128xf32> -> vector<128x128xf32>
    %c0_3 = arith.constant 0 : index
    %c0_4 = arith.constant 0 : index
    %3 = vector.load %arg3[%c0_3, %c0_4] : memref<1x128xf32, #tpu.memory_space<vmem>>, vector<1x128xf32>
    %4 = vector.broadcast %3 : vector<1x128xf32> to vector<128x128xf32>
    %5 = arith.addf %2, %4 : vector<128x128xf32>
    %cst_5 = arith.constant 0.000000e+00 : f32
    %6 = vector.broadcast %cst_5 : f32 to vector<128x128xf32>
    %7 = arith.maximumf %5, %6 : vector<128x128xf32>
    %c0_6 = arith.constant 0 : index
    %c0_7 = arith.constant 0 : index
    %8 = vector.load %arg4[%c0_6, %c0_7] : memref<128x128xf32, #tpu.memory_space<vmem>>, vector<128x128xf32>
    tpu.vector_store %arg4[%c0_6, %c0_7], %7 {strides = array<i32>} : memref<128x128xf32, #tpu.memory_space<vmem>>, vector<128x128xf32>,
    return
  }
  func.func @transform_0(%arg0: i32) -> (i32, i32) {
    %c0_i32 = arith.constant 0 : i32
    %c0_i32_0 = arith.constant 0 : i32
    return %arg0, %c0_i32 : i32, i32
  }
  func.func @transform_1(%arg0: i32) -> (i32, i32) {
    %c0_i32 = arith.constant 0 : i32
    %c0_i32_0 = arith.constant 0 : i32
    %c0_i32_1 = arith.constant 0 : i32
    return %c0_i32, %c0_i32_0 : i32, i32
  }
  func.func @transform_2(%arg0: i32) -> (i32, i32) {
    %c0_i32 = arith.constant 0 : i32
    %c0_i32_0 = arith.constant 0 : i32
    %c0_i32_1 = arith.constant 0 : i32
    return %c0_i32, %c0_i32_0 : i32, i32
  }
  func.func @transform_3(%arg0: i32) -> (i32, i32) {
    %c0_i32 = arith.constant 0 : i32
    %c0_i32_0 = arith.constant 0 : i32
    return %arg0, %c0_i32 : i32, i32
  }
}

</mosaic_0001>

<llo_original>
// kernel: tpu_custom_call.1
$region0: #{tpu_custom_call.1}
  #allocation0 [shape = 'u32[]', space=smem, size = 0x4, offset = 0x4, fixed_abs, tag = 'smem constant byte address 0x4 - core index']
  #allocation1 [shape = 'u32[72,128]{1,0:T(1,128)}', space=vmem, size = 0x9000, scoped, tag = 'internal scratch']
  %s0 = inlined_call_operand.vmem [shape: bf16[128,16], index: 0, kind: input, shape index: {}]
  %s1 = inlined_call_operand.vmem [shape: bf16[16,128], index: 1, kind: input, shape index: {}]
  %s2 = inlined_call_operand.vmem [shape: f32[1,128], index: 2, kind: input, shape index: {}]
  %s3 = inlined_call_operand.hbm [shape: f32[128,128], index: 3, kind: output, shape index: {}]
  %s4 = sld [smem:[#allocation0]]
  $region22: #{tpu_custom_call.1} parent=0
    _
  %s6 = ssub.s32 1, %s4
  %s7 = scalar_select 0, %s6, %s4
  $region1: #{tpu_custom_call.1} parent=0
    #allocation2 [shape = 'u8[65536]{0}', space=vmem, size = 0x10000, scoped, tag = 'output window, operand 0, single buffered']
    #allocation3 [shape = 's32[1]{0}', space=sflag, size = 0x4, scoped, tag = 'scoped memory for tpu_custom_call.1']
    %8 = vsyncpa [#allocation3], 0
    // Predicated region
    $region2: #{tpu_custom_call.1} parent=1 // pred_check
      _
    $region3: #{tpu_custom_call.1} parent=1 // pred_check_branch
      %10 = sbr.rel (0) target = $region5
    $region4: #{tpu_custom_call.1} parent=1 // pred_region
      _
    $region5: #{tpu_custom_call.1} parent=1 // pred_fallthru
      _
    // Predicated region
    $region6: #{tpu_custom_call.1} parent=1 // pred_check
      _
    $region7: #{tpu_custom_call.1} parent=1 // pred_check_branch
      %12 = sbr.rel (0) target = $region9
    $region8: #{tpu_custom_call.1} parent=1 // pred_region
      _
    $region9: #{tpu_custom_call.1} parent=1 // pred_fallthru
      _
    // Predicated region
    $region10: #{tpu_custom_call.1} parent=1 // pred_check
      _
    $region11: #{tpu_custom_call.1} parent=1 // pred_check_branch
      %14 = sbr.rel (0) target = $region13
    $region12: #{tpu_custom_call.1} parent=1 // pred_region
      _
    $region13: #{tpu_custom_call.1} parent=1 // pred_fallthru
      _
    %v16 = vld [vmem:[%s0] sm:$0xf]
    %v17 = vld [vmem:[%s0 + $0x4] sm:$0xf]
    %v18 = vld [vmem:[%s0 + $0x8] sm:$0xf]
    %v19 = vld [vmem:[%s0 + $0xc] sm:$0xf]
    %v20 = vld [vmem:[%s0 + $0x10] sm:$0xf]
    %v21 = vld [vmem:[%s0 + $0x14] sm:$0xf]
    %v22 = vld [vmem:[%s0 + $0x18] sm:$0xf]
    %v23 = vld [vmem:[%s0 + $0x1c] sm:$0xf]
    %v24 = vld [vmem:[%s0 + $0x20] sm:$0xf]
    %v25 = vld [vmem:[%s0 + $0x24] sm:$0xf]
    %v26 = vld [vmem:[%s0 + $0x28] sm:$0xf]
    %v27 = vld [vmem:[%s0 + $0x2c] sm:$0xf]
    %v28 = vld [vmem:[%s0 + $0x30] sm:$0xf]
    %v29 = vld [vmem:[%s0 + $0x34] sm:$0xf]
    %v30 = vld [vmem:[%s0 + $0x38] sm:$0xf]
    %v31 = vld [vmem:[%s0 + $0x3c] sm:$0xf]
    %v32 = vld [vmem:[%s1] sm:$0xf]
    %v33 = vld [vmem:[%s1 + $0x4] sm:$0xf]
    %v34 = vld [vmem:[%s2] sm:$0x1]
    %v36 = vperm.slane %v34, 0
    %v54 = vunpack.c.l.b16 %v16
    %v55 = vunpack.c.l.b16 %v17
    %v56 = vunpack.c.l.b16 %v18
    %v57 = vunpack.c.l.b16 %v19
    %v58 = vunpack.c.l.b16 %v20
    %v59 = vunpack.c.l.b16 %v21
    %v60 = vunpack.c.l.b16 %v22
    %v61 = vunpack.c.l.b16 %v23
    %v62 = vunpack.c.l.b16 %v24
    %v63 = vunpack.c.l.b16 %v25
    %v64 = vunpack.c.l.b16 %v26
    %v65 = vunpack.c.l.b16 %v27
    %v66 = vunpack.c.l.b16 %v28
    %v67 = vunpack.c.l.b16 %v29
    %v68 = vunpack.c.l.b16 %v30
    %v69 = vunpack.c.l.b16 %v31
    %v70 = vpack.c.b16 %v55, %v54
    %v71 = vpack.c.b16 %v57, %v56
    %v72 = vpack.c.b16 %v59, %v58
    %v73 = vpack.c.b16 %v61, %v60
    %v74 = vpack.c.b16 %v63, %v62
    %v75 = vpack.c.b16 %v65, %v64
    %v76 = vpack.c.b16 %v67, %v66
    %v77 = vpack.c.b16 %v69, %v68
    %v80 = vunpack.c.l.b16 %v32
    %v81 = vunpack.c.l.b16 %v33
    %v82 = vpack.c.b16 %v81, %v80
    %vm84 = vcmask 130048
    %v86 = vsel %vm84, %v70, 0
    %v89 = vsel %vm84, %v71, 0
    %v92 = vsel %vm84, %v72, 0
    %v95 = vsel %vm84, %v73, 0
    %v98 = vsel %vm84, %v74, 0
    %v101 = vsel %vm84, %v75, 0
    %v104 = vsel %vm84, %v76, 0
    %v107 = vsel %vm84, %v77, 0
    %109 = vmatpush.bf16.msra.mxu0 0
    %110 = vmatpush.bf16.msra.mxu0 0
    %111 = vmatpush.bf16.msra.mxu0 0
    %112 = vmatpush.bf16.msra.mxu0 0
    %113 = vmatpush.bf16.msra.mxu0 0
    %114 = vmatpush.bf16.msra.mxu0 0
    %115 = vmatpush.bf16.msra.mxu0 0
    %116 = vmatpush.bf16.msra.mxu0 %v82
    %117 = vmatmul.bf16.gmra.mxu0 %v86
    %v118 = vpop.f32.mrf.mxu0
    %v119 = vadd.f32 %v36, %v118
    %v120 = vpop.f32.mrf.mxu0
    %v121 = vadd.f32 %v36, %v120
    %122 = vmatmul.bf16.gmra.mxu0 %v89
    %v123 = vpop.f32.mrf.mxu0
    %v124 = vadd.f32 %v36, %v123
    %v125 = vpop.f32.mrf.mxu0
    %v126 = vadd.f32 %v36, %v125
    %127 = vmatmul.bf16.gmra.mxu0 %v92
    %v128 = vpop.f32.mrf.mxu0
    %v129 = vadd.f32 %v36, %v128
    %v130 = vpop.f32.mrf.mxu0
    %v131 = vadd.f32 %v36, %v130
    %132 = vmatmul.bf16.gmra.mxu0 %v95
    %v133 = vpop.f32.mrf.mxu0
    %v134 = vadd.f32 %v36, %v133
    %v135 = vpop.f32.mrf.mxu0
    %v136 = vadd.f32 %v36, %v135
    %137 = vmatmul.bf16.gmra.mxu0 %v98
    %v138 = vpop.f32.mrf.mxu0
    %v139 = vadd.f32 %v36, %v138
    %v140 = vpop.f32.mrf.mxu0
    %v141 = vadd.f32 %v36, %v140
    %142 = vmatmul.bf16.gmra.mxu0 %v101
    %v143 = vpop.f32.mrf.mxu0
    %v144 = vadd.f32 %v36, %v143
    %v145 = vpop.f32.mrf.mxu0
    %v146 = vadd.f32 %v36, %v145
    %147 = vmatmul.bf16.gmra.mxu0 %v104
    %v148 = vpop.f32.mrf.mxu0
    %v149 = vadd.f32 %v36, %v148
    %v150 = vpop.f32.mrf.mxu0
    %v151 = vadd.f32 %v36, %v150
    %152 = vmatmul.bf16.gmra.mxu0 %v107
    %v153 = vpop.f32.mrf.mxu0
    %v154 = vadd.f32 %v36, %v153
    %v155 = vpop.f32.mrf.mxu0
    %v156 = vadd.f32 %v36, %v155
    %157 = vdwg.mxu0
    %v158 = vmax.f32 %v119, 0.0
    %v159 = vmax.f32 %v121, 0.0
    %v160 = vmax.f32 %v124, 0.0
    %v161 = vmax.f32 %v126, 0.0
    %v162 = vmax.f32 %v129, 0.0
    %v163 = vmax.f32 %v131, 0.0
    %v164 = vmax.f32 %v134, 0.0
    %v165 = vmax.f32 %v136, 0.0
    %v166 = vmax.f32 %v139, 0.0
    %v167 = vmax.f32 %v141, 0.0
    %v168 = vmax.f32 %v144, 0.0
    %v169 = vmax.f32 %v146, 0.0
    %v170 = vmax.f32 %v149, 0.0
    %v171 = vmax.f32 %v151, 0.0
    %v172 = vmax.f32 %v154, 0.0
    %v173 = vmax.f32 %v156, 0.0
    %174 = vst [vmem:[#allocation2] sm:$0xff] %v158
    %175 = vst [vmem:[#allocation2 + $0x8] sm:$0xff] %v159
    %176 = vst [vmem:[#allocation2 + $0x10] sm:$0xff] %v160
    %177 = vst [vmem:[#allocation2 + $0x18] sm:$0xff] %v161
    %178 = vst [vmem:[#allocation2 + $0x20] sm:$0xff] %v162
    %179 = vst [vmem:[#allocation2 + $0x28] sm:$0xff] %v163
    %180 = vst [vmem:[#allocation2 + $0x30] sm:$0xff] %v164
    %181 = vst [vmem:[#allocation2 + $0x38] sm:$0xff] %v165
    %182 = vst [vmem:[#allocation2 + $0x40] sm:$0xff] %v166
    %183 = vst [vmem:[#allocation2 + $0x48] sm:$0xff] %v167
    %184 = vst [vmem:[#allocation2 + $0x50] sm:$0xff] %v168
    %185 = vst [vmem:[#allocation2 + $0x58] sm:$0xff] %v169
    %186 = vst [vmem:[#allocation2 + $0x60] sm:$0xff] %v170
    %187 = vst [vmem:[#allocation2 + $0x68] sm:$0xff] %v171
    %188 = vst [vmem:[#allocation2 + $0x70] sm:$0xff] %v172
    %189 = vst [vmem:[#allocation2 + $0x78] sm:$0xff] %v173
    // Predicated region
    $region14: #{tpu_custom_call.1} parent=1 // pred_check
      _
    $region15: #{tpu_custom_call.1} parent=1 // pred_check_branch
      %191 = sbr.rel (0) target = $region17
    $region16: #{tpu_custom_call.1} parent=1 // pred_region
      %193 = vsyncadd [#allocation3], 0
      %s194 = sshll.u32 [#allocation2], 4
      %s195 = int_to_ptr.vmem [resolvable:$true] %s194
      %s196 = sshll.u32 %s3, 4
      %s197 = int_to_ptr.hbm [resolvable:$true] %s196
      %202 = dma.vmem_to_hbm [thread:$0]  %s195, 2048, %s197, [#allocation3], 128, 128, 8
    $region17: #{tpu_custom_call.1} parent=1 // pred_fallthru
      _
    // Predicated region
    $region18: #{tpu_custom_call.1} parent=1 // pred_check
      _
    $region19: #{tpu_custom_call.1} parent=1 // pred_check_branch
      %204 = sbr.rel (0) target = $region21
    $region20: #{tpu_custom_call.1} parent=1 // pred_region
      %206 = dma.done [#allocation3], 2048
    $region21: #{tpu_custom_call.1} parent=1 // pred_fallthru
      _
    %207 = vsyncpa [#allocation3], 1

</llo_original>
